<compile_context>
chip_gen: v6e
topology: v6e:2x2x1
jax: 0.10.0
libtpu: 0.0.40
codegen_flags: <defaults>
</compile_context>

<pallas_src>
import functools

import jax
import jax.numpy as jnp
from jax import lax
from jax.experimental import pallas as pl
from jax.experimental.pallas import tpu as pltpu


def _round_up(n, m):
    return ((n + m - 1) // m) * m


def conv1d_weight_to_matmul(w):
    """PyTorch Conv1d(k=1) weight (out_ch, in_ch, 1) -> matmul form (in_ch, out_ch)."""
    assert w.ndim == 3 and w.shape[-1] == 1, "expected Conv1d kernel-size-1 weight"
    return jnp.transpose(w[..., 0], (1, 0))


def _vmem_capacity_bytes():
    # Narrow, query-only fallback (cannot mask kernel bugs): if the hardware
    # query is unavailable, assume the smallest per-TC VMEM (v7x: 64 MiB).
    try:
        cap = getattr(pltpu.get_tpu_info(), "vmem_capacity_bytes", None)
        if cap:
            return int(cap)
    except Exception:
        pass
    return 64 * 1024 * 1024


def _ffn_ln_kernel(x_ref, w1_ref, b1_ref, w2_ref, b2_ref, g_ref, beta_ref,
                   o_ref, acc_ref, *, eps):
    """Grid point = (row-tile i, d_hid-chunk k)."""
    k = pl.program_id(1)

    @pl.when(k == 0)
    def _():
        acc_ref[...] = jnp.zeros_like(acc_ref)

    # --- w_1 (Conv1d k=1) chunk: bf16 MXU matmul, f32 accumulate, bias + ReLU.
    x_mxu = x_ref[...].astype(w1_ref.dtype)
    h = jnp.dot(x_mxu, w1_ref[...], preferred_element_type=jnp.float32)
    h = jnp.maximum(h + b1_ref[...], 0.0).astype(w2_ref.dtype)   # bf16 temp

    # --- w_2 chunk: accumulate partial y in f32 scratch.
    acc_ref[...] += jnp.dot(h, w2_ref[...], preferred_element_type=jnp.float32)

    @pl.when(k == pl.num_programs(1) - 1)
    def _():
        # TODO(synk): dropout is identity here (eval mode); training-mode RNG mask not implemented.
        z = acc_ref[...] + b2_ref[...] + x_ref[...].astype(jnp.float32)
        # LayerNorm over the exact d_in features (block last dim == d_in, no mask).
        mean = jnp.mean(z, axis=-1, keepdims=True)
        cent = z - mean
        var = jnp.mean(cent * cent, axis=-1, keepdims=True)
        norm = cent * lax.rsqrt(var + eps)
        o_ref[...] = (norm * g_ref[...] + beta_ref[...]).astype(o_ref.dtype)


def positionwise_ffn(x, w1, b1, w2, b2, gamma, beta, *,
                     tile_m_max=512, eps=1e-5, mxu_dtype=jnp.bfloat16):
    """x: (B, L, d_in).  w1: (d_in, d_hid), w2: (d_hid, d_in) matmul-form weights.

    Returns (B, L, d_in) in x.dtype.  Matches PyTorch PositionwiseFeedForward
    (eval mode) up to bf16-MXU precision.
    """
    B, L, d_in = x.shape
    d_hid = w1.shape[1]
    assert w1.shape == (d_in, d_hid), "w1 must be matmul-form (d_in, d_hid)"
    assert w2.shape == (d_hid, d_in), "w2 must be matmul-form (d_hid, d_in)"
    assert b1.shape == (d_hid,) and b2.shape == (d_in,)
    assert gamma.shape == (d_in,) and beta.shape == (d_in,)

    rows = B * L
    x_bytes = jnp.dtype(x.dtype).itemsize
    w_bytes = jnp.dtype(mxu_dtype).itemsize

    # ---- VMEM footprint model (default double-buffering on every operand).
    def _est(tm, tk):
        io_tiles = 2 * tm * d_in * x_bytes * 2          # x + out tiles, double-buffered
        weights = 2 * 2 * d_in * tk * w_bytes            # W1 + W2 chunks, double-buffered
        vectors = 2 * (tk + 3 * d_in) * 4                # b1, b2, gamma, beta
        acc = tm * d_in * 4                              # f32 accumulator scratch
        temps = tm * tk * (4 + w_bytes) + 4 * tm * d_in * 4
        return io_tiles + weights + vectors + acc + temps

    vmem_cap = _vmem_capacity_bytes()                    # 128 MiB v5e/v6e, 64 MiB v7x
    budget = int(vmem_cap * 0.55)                        # headroom for Mosaic scratch/spills

    # ---- tile_m: as large as possible (multiple of 8, or == rows for tiny inputs).
    tile_m = rows if rows <= tile_m_max else tile_m_max
    if tile_m != rows and tile_m % 8:
        tile_m = max(8, (tile_m // 8) * 8)

    # ---- tile_k: d_hid chunk (multiple of 128). d_hid is padded (weights only,
    #      zeros) so tile_k divides d_hid_pad exactly -> accumulation stays exact.
    tile_k = _round_up(d_hid, 128)

    while _est(tile_m, tile_k) > budget:
        if tile_k >= max(1024, 2 * tile_m):              # big-FFN case (v7x): stream d_hid
            tile_k = max(128, _round_up(tile_k // 2, 128))
        elif tile_m > 256:
            tile_m = max(8, ((tile_m // 2) // 8) * 8)
        elif tile_k > 128:
            tile_k = max(128, _round_up(tile_k // 2, 128))
        elif tile_m > 8:
            tile_m = max(8, ((tile_m // 2) // 8) * 8)
        else:
            break

    d_hid_pad = _round_up(d_hid, tile_k)
    num_k = d_hid_pad // tile_k
    num_m = pl.cdiv(rows, tile_m)

    # ---- parameter-side padding only (cheap; zero pads are exact no-ops).
    w1_p = jnp.pad(w1, ((0, 0), (0, d_hid_pad - d_hid))).astype(mxu_dtype)
    w2_p = jnp.pad(w2, ((0, d_hid_pad - d_hid), (0, 0))).astype(mxu_dtype)
    b1_p = jnp.pad(b1, (0, d_hid_pad - d_hid)).reshape(1, d_hid_pad).astype(jnp.float32)
    b2_p = b2.reshape(1, d_in).astype(jnp.float32)
    g_p = gamma.reshape(1, d_in).astype(jnp.float32)
    be_p = beta.reshape(1, d_in).astype(jnp.float32)

    x2d = x.reshape(rows, d_in)                          # free: no pad, no cast, no copy

    est = _est(tile_m, tile_k)
    vmem_limit = int(min(vmem_cap * 0.8, max(32 * 1024 * 1024, est * 1.5)))

    cost = pl.CostEstimate(
        flops=4 * rows * d_in * d_hid,
        transcendentals=rows,                            # rsqrt per row
        bytes_accessed=int(2 * rows * d_in * x_bytes
                           + num_m * 2 * d_in * d_hid_pad * w_bytes
                           + (d_hid_pad + 3 * d_in) * 4))

    kernel = functools.partial(_ffn_ln_kernel, eps=eps)

    out2d = pl.pallas_call(
        kernel,
        out_shape=jax.ShapeDtypeStruct((rows, d_in), x.dtype),
        grid_spec=pltpu.PrefetchScalarGridSpec(
            num_scalar_prefetch=0,
            grid=(num_m, num_k),
            in_specs=[
                pl.BlockSpec((tile_m, d_in), lambda i, k: (i, 0)),   # x (resident across k)
                pl.BlockSpec((d_in, tile_k), lambda i, k: (0, k)),   # W1 chunk (bf16)
                pl.BlockSpec((1, tile_k), lambda i, k: (0, k)),      # b1 chunk
                pl.BlockSpec((tile_k, d_in), lambda i, k: (k, 0)),   # W2 chunk (bf16)
                pl.BlockSpec((1, d_in), lambda i, k: (0, 0)),        # b2
                pl.BlockSpec((1, d_in), lambda i, k: (0, 0)),        # gamma
                pl.BlockSpec((1, d_in), lambda i, k: (0, 0)),        # beta
            ],
            out_specs=pl.BlockSpec((tile_m, d_in), lambda i, k: (i, 0)),
            scratch_shapes=[pltpu.VMEM((tile_m, d_in), jnp.float32)],  # y accumulator
        ),
        compiler_params=pltpu.CompilerParams(
            dimension_semantics=("parallel", "arbitrary"),
            vmem_limit_bytes=vmem_limit),
        cost_estimate=cost,
    )(x2d, w1_p, b1_p, w2_p, b2_p, g_p, be_p)

    return out2d.reshape(B, L, d_in)


if __name__ == "__main__":
    # Small deterministic setup: B=2, L=8, d_in=32, d_hid=64
    B, L, d_in, d_hid = 2, 8, 32, 64
    key = jax.random.PRNGKey(0)
    kx, kw1, kb1, kw2, kb2 = jax.random.split(key, 5)

    x = jax.random.normal(kx, (B, L, d_in), dtype=jnp.float32)

    # Build weights in the native PyTorch Conv1d layout (out_ch, in_ch, 1),
    # then convert to matmul form — exercising the documented conversion path.
    w1_conv = jax.random.normal(kw1, (d_hid, d_in, 1), dtype=jnp.float32) * 0.1
    w2_conv = jax.random.normal(kw2, (d_in, d_hid, 1), dtype=jnp.float32) * 0.1
    b1 = jax.random.normal(kb1, (d_hid,), dtype=jnp.float32) * 0.1
    b2 = jax.random.normal(kb2, (d_in,), dtype=jnp.float32) * 0.1
    gamma = jnp.ones((d_in,), dtype=jnp.float32)
    beta = jnp.zeros((d_in,), dtype=jnp.float32)

    w1 = conv1d_weight_to_matmul(w1_conv)   # (d_in, d_hid)
    w2 = conv1d_weight_to_matmul(w2_conv)   # (d_hid, d_in)

    out = positionwise_ffn(x, w1, b1, w2, b2, gamma, beta)
    out = jax.block_until_ready(out)

    # Pure-JAX f32 reference (dropout = identity in eval mode).
    h_ref = jnp.maximum(jnp.einsum("bld,dh->blh", x, w1) + b1, 0.0)
    y_ref = jnp.einsum("blh,hd->bld", h_ref, w2) + b2
    z_ref = y_ref + x
    mu = jnp.mean(z_ref, -1, keepdims=True)
    var = jnp.mean((z_ref - mu) ** 2, -1, keepdims=True)
    ref = (z_ref - mu) / jnp.sqrt(var + 1e-5) * gamma + beta

    # bf16 MXU operands with f32 accumulation -> loosened tolerance vs f32 ref.
    assert out.shape == ref.shape
    err = float(jnp.max(jnp.abs(out - ref)))
    assert err < 3e-2, err

    print("KERNEL_OK")
</pallas_src>

<mosaic_0001>
module attributes {stable_mosaic.version = 11 : i64} {
  func.func @_ffn_ln_kernel(%arg0: i32, %arg1: i32, %arg2: memref<16x32xf32, #tpu.memory_space<vmem>>, %arg3: memref<32x128xbf16, #tpu.memory_space<vmem>>, %arg4: memref<1x128xf32, #tpu.memory_space<vmem>>, %arg5: memref<128x32xbf16, #tpu.memory_space<vmem>>, %arg6: memref<1x32xf32, #tpu.memory_space<vmem>>, %arg7: memref<1x32xf32, #tpu.memory_space<vmem>>, %arg8: memref<1x32xf32, #tpu.memory_space<vmem>>, %arg9: memref<16x32xf32, #tpu.memory_space<vmem>>, %arg10: memref<16x32xf32, #tpu.memory_space<vmem>>) attributes {dimension_semantics = [#tpu.dimension_semantics<parallel>, #tpu.dimension_semantics<arbitrary>], iteration_bounds = array<i64: 1, 1>, scalar_prefetch = 0 : i64, scratch_operands = 1 : i64, tpu.core_type = #tpu.core_type<tc>, window_params = [{transform_indices = @transform_0, window_bounds = array<i64: 16, 32>}, {transform_indices = @transform_1, window_bounds = array<i64: 32, 128>}, {transform_indices = @transform_2, window_bounds = array<i64: 1, 128>}, {transform_indices = @transform_3, window_bounds = array<i64: 128, 32>}, {pipeline_mode = #tpu.pipeline_mode<synchronous>, transform_indices = @transform_4, window_bounds = array<i64: 1, 32>}, {pipeline_mode = #tpu.pipeline_mode<synchronous>, transform_indices = @transform_5, window_bounds = array<i64: 1, 32>}, {pipeline_mode = #tpu.pipeline_mode<synchronous>, transform_indices = @transform_6, window_bounds = array<i64: 1, 32>}, {transform_indices = @transform_7, window_bounds = array<i64: 16, 32>}]} {
    %c0_i32 = arith.constant 0 : i32
    %0 = arith.cmpi eq, %arg1, %c0_i32 : i32
    %1 = arith.extui %0 : i1 to i32
    %c0_i32_0 = arith.constant 0 : i32
    %2 = arith.cmpi ne, %1, %c0_i32_0 : i32
    scf.if %2 {
      %cst_16 = arith.constant 0.000000e+00 : f32
      %21 = vector.broadcast %cst_16 : f32 to vector<16x32xf32>
      %c0_17 = arith.constant 0 : index
      %c0_18 = arith.constant 0 : index
      %22 = vector.load %arg10[%c0_17, %c0_18] : memref<16x32xf32, #tpu.memory_space<vmem>>, vector<16x32xf32>
      tpu.vector_store %arg10[%c0_17, %c0_18], %21 {strides = array<i32>} : memref<16x32xf32, #tpu.memory_space<vmem>>, vector<16x32xf32>,
    } else {
    }
    %c0 = arith.constant 0 : index
    %c0_1 = arith.constant 0 : index
    %3 = vector.load %arg2[%c0, %c0_1] : memref<16x32xf32, #tpu.memory_space<vmem>>, vector<16x32xf32>
    %4 = arith.truncf %3 : vector<16x32xf32> to vector<16x32xbf16>
    %c0_2 = arith.constant 0 : index
    %c0_3 = arith.constant 0 : index
    %5 = vector.load %arg3[%c0_2, %c0_3] : memref<32x128xbf16, #tpu.memory_space<vmem>>, vector<32x128xbf16>
    %cst = arith.constant dense<0.000000e+00> : vector<16x128xf32>
    %6 = tpu.matmul %4, %5, %cst {dimension_numbers = #tpu.dot_dimension_numbers<[1], [0], [0], [1], [0, 0, 1, 1], [], []>} : vector<16x32xbf16>, vector<32x128xbf16>, vector<16x128xf32> -> vector<16x128xf32>
    %c0_4 = arith.constant 0 : index
    %c0_5 = arith.constant 0 : index
    %7 = vector.load %arg4[%c0_4, %c0_5] : memref<1x128xf32, #tpu.memory_space<vmem>>, vector<1x128xf32>
    %8 = vector.broadcast %7 : vector<1x128xf32> to vector<16x128xf32>
    %9 = arith.addf %6, %8 : vector<16x128xf32>
    %cst_6 = arith.constant 0.000000e+00 : f32
    %10 = vector.broadcast %cst_6 : f32 to vector<16x128xf32>
    %11 = arith.maximumf %9, %10 : vector<16x128xf32>
    %12 = arith.truncf %11 : vector<16x128xf32> to vector<16x128xbf16>
    %c0_7 = arith.constant 0 : index
    %c0_8 = arith.constant 0 : index
    %13 = vector.load %arg10[%c0_7, %c0_8] : memref<16x32xf32, #tpu.memory_space<vmem>>, vector<16x32xf32>
    %c0_9 = arith.constant 0 : index
    %c0_10 = arith.constant 0 : index
    %14 = vector.load %arg5[%c0_9, %c0_10] : memref<128x32xbf16, #tpu.memory_space<vmem>>, vector<128x32xbf16>
    %cst_11 = arith.constant dense<0.000000e+00> : vector<16x32xf32>
    %15 = tpu.matmul %12, %14, %cst_11 {dimension_numbers = #tpu.dot_dimension_numbers<[1], [0], [0], [1], [0, 0, 1, 1], [], []>} : vector<16x128xbf16>, vector<128x32xbf16>, vector<16x32xf32> -> vector<16x32xf32>
    %16 = arith.addf %13, %15 : vector<16x32xf32>
    %c0_12 = arith.constant 0 : index
    %c0_13 = arith.constant 0 : index
    %17 = vector.load %arg10[%c0_12, %c0_13] : memref<16x32xf32, #tpu.memory_space<vmem>>, vector<16x32xf32>
    tpu.vector_store %arg10[%c0_12, %c0_13], %16 {strides = array<i32>} : memref<16x32xf32, #tpu.memory_space<vmem>>, vector<16x32xf32>,
    %c0_i32_14 = arith.constant 0 : i32
    %18 = arith.cmpi eq, %arg1, %c0_i32_14 : i32
    %19 = arith.extui %18 : i1 to i32
    %c0_i32_15 = arith.constant 0 : i32
    %20 = arith.cmpi ne, %19, %c0_i32_15 : i32
    scf.if %20 {
      %c0_16 = arith.constant 0 : index
      %c0_17 = arith.constant 0 : index
      %21 = vector.load %arg10[%c0_16, %c0_17] : memref<16x32xf32, #tpu.memory_space<vmem>>, vector<16x32xf32>
      %c0_18 = arith.constant 0 : index
      %c0_19 = arith.constant 0 : index
      %22 = vector.load %arg6[%c0_18, %c0_19] : memref<1x32xf32, #tpu.memory_space<vmem>>, vector<1x32xf32>
      %23 = vector.broadcast %22 : vector<1x32xf32> to vector<16x32xf32>
      %24 = arith.addf %21, %23 : vector<16x32xf32>
      %c0_20 = arith.constant 0 : index
      %c0_21 = arith.constant 0 : index
      %25 = vector.load %arg2[%c0_20, %c0_21] : memref<16x32xf32, #tpu.memory_space<vmem>>, vector<16x32xf32>
      %26 = arith.addf %24, %25 : vector<16x32xf32>
      %cst_22 = arith.constant dense<0.000000e+00> : vector<16xf32>
      %27 = vector.multi_reduction <add>, %26, %cst_22 [1] : vector<16x32xf32> to vector<16xf32>
      %28 = vector.shape_cast %27 : vector<16xf32> to vector<16x1xf32>
      %cst_23 = arith.constant 3.200000e+01 : f32
      %29 = vector.broadcast %cst_23 : f32 to vector<16x1xf32>
      %30 = arith.divf %28, %29 : vector<16x1xf32>
      %31 = vector.broadcast %30 : vector<16x1xf32> to vector<16x32xf32>
      %32 = arith.subf %26, %31 : vector<16x32xf32>
      %33 = arith.mulf %32, %32 : vector<16x32xf32>
      %cst_24 = arith.constant dense<0.000000e+00> : vector<16xf32>
      %34 = vector.multi_reduction <add>, %33, %cst_24 [1] : vector<16x32xf32> to vector<16xf32>
      %35 = vector.shape_cast %34 : vector<16xf32> to vector<16x1xf32>
      %cst_25 = arith.constant 3.200000e+01 : f32
      %36 = vector.broadcast %cst_25 : f32 to vector<16x1xf32>
      %37 = arith.divf %35, %36 : vector<16x1xf32>
      %cst_26 = arith.constant 9.99999974E-6 : f32
      %38 = vector.broadcast %cst_26 : f32 to vector<16x1xf32>
      %39 = arith.addf %37, %38 : vector<16x1xf32>
      %40 = math.rsqrt %39 : vector<16x1xf32>
      %41 = vector.broadcast %40 : vector<16x1xf32> to vector<16x32xf32>
      %42 = arith.mulf %32, %41 : vector<16x32xf32>
      %c0_27 = arith.constant 0 : index
      %c0_28 = arith.constant 0 : index
      %43 = vector.load %arg7[%c0_27, %c0_28] : memref<1x32xf32, #tpu.memory_space<vmem>>, vector<1x32xf32>
      %44 = vector.broadcast %43 : vector<1x32xf32> to vector<16x32xf32>
      %45 = arith.mulf %42, %44 : vector<16x32xf32>
      %c0_29 = arith.constant 0 : index
      %c0_30 = arith.constant 0 : index
      %46 = vector.load %arg8[%c0_29, %c0_30] : memref<1x32xf32, #tpu.memory_space<vmem>>, vector<1x32xf32>
      %47 = vector.broadcast %46 : vector<1x32xf32> to vector<16x32xf32>
      %48 = arith.addf %45, %47 : vector<16x32xf32>
      %c0_31 = arith.constant 0 : index
      %c0_32 = arith.constant 0 : index
      %49 = vector.load %arg9[%c0_31, %c0_32] : memref<16x32xf32, #tpu.memory_space<vmem>>, vector<16x32xf32>
      tpu.vector_store %arg9[%c0_31, %c0_32], %48 {strides = array<i32>} : memref<16x32xf32, #tpu.memory_space<vmem>>, vector<16x32xf32>,
    } else {
    }
    return
  }
  func.func @transform_0(%arg0: i32, %arg1: i32) -> (i32, i32) {
    %c0_i32 = arith.constant 0 : i32
    %c0_i32_0 = arith.constant 0 : i32
    return %arg0, %c0_i32 : i32, i32
  }
  func.func @transform_1(%arg0: i32, %arg1: i32) -> (i32, i32) {
    %c0_i32 = arith.constant 0 : i32
    %c0_i32_0 = arith.constant 0 : i32
    return %c0_i32, %arg1 : i32, i32
  }
  func.func @transform_2(%arg0: i32, %arg1: i32) -> (i32, i32) {
    %c0_i32 = arith.constant 0 : i32
    %c0_i32_0 = arith.constant 0 : i32
    return %c0_i32, %arg1 : i32, i32
  }
  func.func @transform_3(%arg0: i32, %arg1: i32) -> (i32, i32) {
    %c0_i32 = arith.constant 0 : i32
    %c0_i32_0 = arith.constant 0 : i32
    return %arg1, %c0_i32 : i32, i32
  }
  func.func @transform_4(%arg0: i32, %arg1: i32) -> (i32, i32) {
    %c0_i32 = arith.constant 0 : i32
    %c0_i32_0 = arith.constant 0 : i32
    %c0_i32_1 = arith.constant 0 : i32
    return %c0_i32, %c0_i32_0 : i32, i32
  }
  func.func @transform_5(%arg0: i32, %arg1: i32) -> (i32, i32) {
    %c0_i32 = arith.constant 0 : i32
    %c0_i32_0 = arith.constant 0 : i32
    %c0_i32_1 = arith.constant 0 : i32
    return %c0_i32, %c0_i32_0 : i32, i32
  }
  func.func @transform_6(%arg0: i32, %arg1: i32) -> (i32, i32) {
    %c0_i32 = arith.constant 0 : i32
    %c0_i32_0 = arith.constant 0 : i32
    %c0_i32_1 = arith.constant 0 : i32
    return %c0_i32, %c0_i32_0 : i32, i32
  }
  func.func @transform_7(%arg0: i32, %arg1: i32) -> (i32, i32) {
    %c0_i32 = arith.constant 0 : i32
    %c0_i32_0 = arith.constant 0 : i32
    return %arg0, %c0_i32 : i32, i32
  }
}

</mosaic_0001>

<llo_original>
// kernel: tpu_custom_call.1
$region0: #{tpu_custom_call.1}
  #allocation0 [shape = 'u32[]', space=smem, size = 0x4, offset = 0x4, fixed_abs, tag = 'smem constant byte address 0x4 - core index']
  #allocation1 [shape = 'u32[144,128]{1,0:T(1,128)}', space=vmem, size = 0x12000, scoped, tag = 'internal scratch']
  #allocation2 [shape = 'f32[16,32]{1,0:T(8,128)}', space=vmem, size = 0x2000, scoped, tag = 'scratch operand']
  %s0 = inlined_call_operand.vmem [shape: f32[16,32], index: 0, kind: input, shape index: {}]
  %s1 = inlined_call_operand.vmem [shape: bf16[32,128], index: 1, kind: input, shape index: {}]
  %s2 = inlined_call_operand.vmem [shape: f32[1,128], index: 2, kind: input, shape index: {}]
  %s3 = inlined_call_operand.vmem [shape: bf16[128,32], index: 3, kind: input, shape index: {}]
  %s4 = inlined_call_operand.vmem [shape: f32[1,32], index: 4, kind: input, shape index: {}]
  %s5 = inlined_call_operand.vmem [shape: f32[1,32], index: 5, kind: input, shape index: {}]
  %s6 = inlined_call_operand.vmem [shape: f32[1,32], index: 6, kind: input, shape index: {}]
  %s7 = inlined_call_operand.hbm [shape: f32[16,32], index: 7, kind: output, shape index: {}]
  %s8 = sld [smem:[#allocation0]]
  $region46: #{tpu_custom_call.1} parent=0
    _
  %s10 = ssub.s32 1, %s8
  %s11 = scalar_select 0, %s10, %s8
  $region1: #{tpu_custom_call.1} parent=0
    #allocation3 [shape = 'u8[8192]{0}', space=vmem, size = 0x2000, scoped, tag = 'output window, operand 0, single buffered']
    #allocation4 [shape = 's32[1]{0}', space=sflag, size = 0x4, scoped, tag = 'scoped memory for tpu_custom_call.1']
    %12 = vsyncpa [#allocation4], 0
    // Predicated region
    $region2: #{tpu_custom_call.1} parent=1 // pred_check
      _
    $region3: #{tpu_custom_call.1} parent=1 // pred_check_branch
      %14 = sbr.rel (0) target = $region5
    $region4: #{tpu_custom_call.1} parent=1 // pred_region
      _
    $region5: #{tpu_custom_call.1} parent=1 // pred_fallthru
      _
    // Predicated region
    $region6: #{tpu_custom_call.1} parent=1 // pred_check
      _
    $region7: #{tpu_custom_call.1} parent=1 // pred_check_branch
      %16 = sbr.rel (0) target = $region9
    $region8: #{tpu_custom_call.1} parent=1 // pred_region
      _
    $region9: #{tpu_custom_call.1} parent=1 // pred_fallthru
      _
    // Predicated region
    $region10: #{tpu_custom_call.1} parent=1 // pred_check
      _
    $region11: #{tpu_custom_call.1} parent=1 // pred_check_branch
      %18 = sbr.rel (0) target = $region13
    $region12: #{tpu_custom_call.1} parent=1 // pred_region
      _
    $region13: #{tpu_custom_call.1} parent=1 // pred_fallthru
      _
    // Predicated region
    $region14: #{tpu_custom_call.1} parent=1 // pred_check
      _
    $region15: #{tpu_custom_call.1} parent=1 // pred_check_branch
      %20 = sbr.rel (0) target = $region17
    $region16: #{tpu_custom_call.1} parent=1 // pred_region
      _
    $region17: #{tpu_custom_call.1} parent=1 // pred_fallthru
      _
    // Predicated region
    $region18: #{tpu_custom_call.1} parent=1 // pred_check
      _
    $region19: #{tpu_custom_call.1} parent=1 // pred_check_branch
      %22 = sbr.rel (0) target = $region21
    $region20: #{tpu_custom_call.1} parent=1 // pred_region
      _
    $region21: #{tpu_custom_call.1} parent=1 // pred_fallthru
      _
    // Predicated region
    $region22: #{tpu_custom_call.1} parent=1 // pred_check
      _
    $region23: #{tpu_custom_call.1} parent=1 // pred_check_branch
      %24 = sbr.rel (0) target = $region25
    $region24: #{tpu_custom_call.1} parent=1 // pred_region
      _
    $region25: #{tpu_custom_call.1} parent=1 // pred_fallthru
      _
    // Predicated region
    $region26: #{tpu_custom_call.1} parent=1 // pred_check
      _
    $region27: #{tpu_custom_call.1} parent=1 // pred_check_branch
      %26 = sbr.rel (0) target = $region29
    $region28: #{tpu_custom_call.1} parent=1 // pred_region
      _
    $region29: #{tpu_custom_call.1} parent=1 // pred_fallthru
      _
    %p28 = scmp.eq.s32.totalorder 0, 0
    // Predicated region
    $region30: #{tpu_custom_call.1} parent=1 // pred_check
      %p29 = pneg %p28
    $region31: #{tpu_custom_call.1} parent=1 // pred_check_branch
      %31 = sbr.rel (%p29) target = $region33
    $region32: #{tpu_custom_call.1} parent=1 // pred_region
      %vm32 = vcmask 261120
      %33 = vst.msk [vmem:[#allocation2] sm:$0xff] %vm32, 0.0
      %34 = vst.msk [vmem:[#allocation2 + $0x8] sm:$0xff] %vm32, 0.0
    $region33: #{tpu_custom_call.1} parent=1 // pred_fallthru
      _
    %v35 = vld [vmem:[%s0] sm:$0xff]
    %v36 = vld [vmem:[%s0 + $0x8] sm:$0xff]
    %v37 = vpack.c.bf16 %v36, %v35
    %v38 = vld [vmem:[%s1] sm:$0xf]
    %v39 = vld [vmem:[%s1 + $0x4] sm:$0xf]
    %v40 = vld [vmem:[%s1 + $0x8] sm:$0xf]
    %v41 = vld [vmem:[%s1 + $0xc] sm:$0xf]
    %v42 = vld [vmem:[%s2] sm:$0x1]
    %v44 = vlaneseq
    %v45 = vshrl.u32 %v44, 7
    %v46 = vsub.s32 0, %v45
    %v47 = vrot.slane %v42, %v46
    %v53 = vunpack.c.l.b16 %v38
    %v54 = vunpack.c.l.b16 %v39
    %v55 = vunpack.c.l.b16 %v40
    %v56 = vunpack.c.l.b16 %v41
    %v57 = vpack.c.b16 %v54, %v53
    %v58 = vpack.c.b16 %v56, %v55
    %vm61 = vcmask 261120
    %v63 = vsel %vm61, %v37, 0
    %65 = vmatprep.subr.bf16.mxu0 0
    %66 = vmatpush1.bf16.msra.mxu0 0
    %67 = vmatprep.subr.bf16.mxu0 0
    %68 = vmatpush1.bf16.msra.mxu0 0
    %69 = vmatprep.subr.bf16.mxu0 0
    %70 = vmatpush1.bf16.msra.mxu0 0
    %71 = vmatprep.subr.bf16.mxu0 0
    %72 = vmatpush1.bf16.msra.mxu0 0
    %73 = vmatprep.subr.bf16.mxu0 0
    %74 = vmatpush1.bf16.msra.mxu0 0
    %75 = vmatprep.subr.bf16.mxu0 0
    %76 = vmatpush1.bf16.msra.mxu0 0
    %77 = vmatprep.subr.bf16.mxu0 0
    %78 = vmatpush1.bf16.msra.mxu0 %v58
    %79 = vmatprep.subr.bf16.mxu0 0
    %80 = vmatpush1.bf16.msra.mxu0 %v57
    %81 = vmatprep.subr.bf16.mxu0 0
    %82 = vmatpush2.bf16.msra.mxu0 0
    %83 = vmatprep.subr.bf16.mxu0 0
    %84 = vmatpush2.bf16.msra.mxu0 0
    %85 = vmatprep.subr.bf16.mxu0 0
    %86 = vmatpush2.bf16.msra.mxu0 0
    %87 = vmatprep.subr.bf16.mxu0 0
    %88 = vmatpush2.bf16.msra.mxu0 0
    %89 = vmatprep.subr.bf16.mxu0 0
    %90 = vmatpush2.bf16.msra.mxu0 0
    %91 = vmatprep.subr.bf16.mxu0 0
    %92 = vmatpush2.bf16.msra.mxu0 0
    %93 = vmatprep.subr.bf16.mxu0 0
    %94 = vmatpush2.bf16.msra.mxu0 0
    %95 = vmatprep.subr.bf16.mxu0 0
    %96 = vmatpush2.bf16.msra.mxu0 0
    %97 = vmatprep.mubr.bf16.mxu0 0
    %98 = vmatmul.mubr.bf16.gmra.mxu0 %v63
    %v99 = vpop.f32.mrf.mxu0
    %v100 = vadd.f32 %v47, %v99
    %v101 = vpop.f32.mrf.mxu0
    %v102 = vpop.f32.mrf.mxu0
    %v103 = vadd.f32 %v47, %v102
    %v104 = vpop.f32.mrf.mxu0
    %105 = vdwg.mxu0
    %v106 = vmax.f32 %v100, 0.0
    %v107 = vmax.f32 %v103, 0.0
    %v108 = vpack.c.bf16 %v107, %v106
    %v109 = vld [vmem:[#allocation2] sm:$0xff]
    %v110 = vld [vmem:[#allocation2 + $0x8] sm:$0xff]
    %v111 = vld [vmem:[%s3] sm:$0xf]
    %v112 = vld [vmem:[%s3 + $0x4] sm:$0xf]
    %v113 = vld [vmem:[%s3 + $0x8] sm:$0xf]
    %v114 = vld [vmem:[%s3 + $0xc] sm:$0xf]
    %v115 = vld [vmem:[%s3 + $0x10] sm:$0xf]
    %v116 = vld [vmem:[%s3 + $0x14] sm:$0xf]
    %v117 = vld [vmem:[%s3 + $0x18] sm:$0xf]
    %v118 = vld [vmem:[%s3 + $0x1c] sm:$0xf]
    %v119 = vld [vmem:[%s3 + $0x20] sm:$0xf]
    %v120 = vld [vmem:[%s3 + $0x24] sm:$0xf]
    %v121 = vld [vmem:[%s3 + $0x28] sm:$0xf]
    %v122 = vld [vmem:[%s3 + $0x2c] sm:$0xf]
    %v123 = vld [vmem:[%s3 + $0x30] sm:$0xf]
    %v124 = vld [vmem:[%s3 + $0x34] sm:$0xf]
    %v125 = vld [vmem:[%s3 + $0x38] sm:$0xf]
    %v126 = vld [vmem:[%s3 + $0x3c] sm:$0xf]
    %v143 = vunpack.c.l.b16 %v111
    %v144 = vunpack.c.l.b16 %v112
    %v145 = vunpack.c.l.b16 %v113
    %v146 = vunpack.c.l.b16 %v114
    %v147 = vunpack.c.l.b16 %v115
    %v148 = vunpack.c.l.b16 %v116
    %v149 = vunpack.c.l.b16 %v117
    %v150 = vunpack.c.l.b16 %v118
    %v151 = vunpack.c.l.b16 %v119
    %v152 = vunpack.c.l.b16 %v120
    %v153 = vunpack.c.l.b16 %v121
    %v154 = vunpack.c.l.b16 %v122
    %v155 = vunpack.c.l.b16 %v123
    %v156 = vunpack.c.l.b16 %v124
    %v157 = vunpack.c.l.b16 %v125
    %v158 = vunpack.c.l.b16 %v126
    %v159 = vpack.c.b16 %v144, %v143
    %v160 = vpack.c.b16 %v146, %v145
    %v161 = vpack.c.b16 %v148, %v147
    %v162 = vpack.c.b16 %v150, %v149
    %v163 = vpack.c.b16 %v152, %v151
    %v164 = vpack.c.b16 %v154, %v153
    %v165 = vpack.c.b16 %v156, %v155
    %v166 = vpack.c.b16 %v158, %v157
    %175 = vmatprep.subr.bf16.mxu0 0
    %176 = vmatpush1.bf16.msra.mxu0 %v166
    %177 = vmatprep.subr.bf16.mxu0 0
    %178 = vmatpush1.bf16.msra.mxu0 %v165
    %179 = vmatprep.subr.bf16.mxu0 0
    %180 = vmatpush1.bf16.msra.mxu0 %v164
    %181 = vmatprep.subr.bf16.mxu0 0
    %182 = vmatpush1.bf16.msra.mxu0 %v163
    %183 = vmatprep.subr.bf16.mxu0 0
    %184 = vmatpush1.bf16.msra.mxu0 %v162
    %185 = vmatprep.subr.bf16.mxu0 0
    %186 = vmatpush1.bf16.msra.mxu0 %v161
    %187 = vmatprep.subr.bf16.mxu0 0
    %188 = vmatpush1.bf16.msra.mxu0 %v160
    %189 = vmatprep.subr.bf16.mxu0 0
    %190 = vmatpush1.bf16.msra.mxu0 %v159
    %191 = vmatprep.subr.bf16.mxu0 0
    %192 = vmatpush2.bf16.msra.mxu0 0
    %193 = vmatprep.subr.bf16.mxu0 0
    %194 = vmatpush2.bf16.msra.mxu0 0
    %195 = vmatprep.subr.bf16.mxu0 0
    %196 = vmatpush2.bf16.msra.mxu0 0
    %197 = vmatprep.subr.bf16.mxu0 0
    %198 = vmatpush2.bf16.msra.mxu0 0
    %199 = vmatprep.subr.bf16.mxu0 0
    %200 = vmatpush2.bf16.msra.mxu0 0
    %201 = vmatprep.subr.bf16.mxu0 0
    %202 = vmatpush2.bf16.msra.mxu0 0
    %203 = vmatprep.subr.bf16.mxu0 0
    %204 = vmatpush2.bf16.msra.mxu0 0
    %205 = vmatprep.subr.bf16.mxu0 0
    %206 = vmatpush2.bf16.msra.mxu0 0
    %207 = vmatprep.mubr.bf16.mxu0 0
    %208 = vmatmul.mubr.bf16.gmra.mxu0 %v108
    %v209 = vpop.f32.mrf.mxu0
    %v210 = vadd.f32 0.0, %v209
    %v211 = vpop.f32.mrf.mxu0
    %v212 = vpop.f32.mrf.mxu0
    %v213 = vadd.f32 0.0, %v212
    %v214 = vpop.f32.mrf.mxu0
    %215 = vdwg.mxu0
    %v216 = vadd.f32 %v109, %v210
    %v217 = vadd.f32 %v110, %v213
    %218 = vst.msk [vmem:[#allocation2] sm:$0xff] %vm61, %v216
    %219 = vst.msk [vmem:[#allocation2 + $0x8] sm:$0xff] %vm61, %v217
    // Predicated region
    $region34: #{tpu_custom_call.1} parent=1 // pred_check
      %p220 = pneg %p28
    $region35: #{tpu_custom_call.1} parent=1 // pred_check_branch
      %222 = sbr.rel (%p220) target = $region37
    $region36: #{tpu_custom_call.1} parent=1 // pred_region
      %v223 = vld [vmem:[#allocation2] sm:$0xff]
      %v224 = vld [vmem:[#allocation2 + $0x8] sm:$0xff]
      %v225 = vld [vmem:[%s4] sm:$0x1]
      %v227 = vlaneseq
      %v228 = vshrl.u32 %v227, 7
      %v229 = vsub.s32 0, %v228
      %v230 = vrot.slane %v225, %v229
      %v232 = vadd.f32 %v223, %v230
      %v233 = vadd.f32 %v224, %v230
      %v234 = vld [vmem:[%s0] sm:$0xff]
      %v235 = vld [vmem:[%s0 + $0x8] sm:$0xff]
      %v236 = vadd.f32 %v232, %v234
      %v237 = vadd.f32 %v233, %v235
      %v238 = vsel %vm61, %v236, 0.0
      %239 = vadd.xlane.f32.xlu0 %v238
      %v240 = vpop.xlane.xlu0 %239
      %v241 = vsel %vm61, %v237, 0.0
      %242 = vadd.xlane.f32.xlu0 %v241
      %v243 = vpop.xlane.xlu0 %242
      %v244 = vrcp.pop 32.0
      %v245 = vmul.f32 %v240, %v244
      %v246 = vmul.f32 %v243, %v244
      %v247 = vsub.f32 %v236, %v245
      %v248 = vsub.f32 %v237, %v246
      %v249 = vmul.f32 %v247, %v247
      %v250 = vmul.f32 %v248, %v248
      %v251 = vsel %vm61, %v249, 0.0
      %252 = vadd.xlane.f32.xlu0 %v251
      %v253 = vpop.xlane.xlu0 %252
      %v254 = vsel %vm61, %v250, 0.0
      %255 = vadd.xlane.f32.xlu0 %v254
      %v256 = vpop.xlane.xlu0 %255
      %v257 = vmul.f32 %v253, %v244
      %v258 = vmul.f32 %v256, %v244
      %v259 = vadd.f32 %v257, 1e-05
      %v260 = vadd.f32 %v258, 1e-05
      %v261 = vrsqrt.pop %v259
      %v262 = vrsqrt.pop %v260
      %v263 = vmul.f32 %v247, %v261
      %v264 = vmul.f32 %v248, %v262
      %v265 = vld [vmem:[%s5] sm:$0x1]
      %v267 = vlaneseq
      %v268 = vshrl.u32 %v267, 7
      %v269 = vsub.s32 0, %v268
      %v270 = vrot.slane %v265, %v269
      %v272 = vmul.f32 %v263, %v270
      %v273 = vmul.f32 %v264, %v270
      %v274 = vld [vmem:[%s6] sm:$0x1]
      %v276 = vlaneseq
      %v277 = vshrl.u32 %v276, 7
      %v278 = vsub.s32 0, %v277
      %v279 = vrot.slane %v274, %v278
      %v281 = vadd.f32 %v272, %v279
      %v282 = vadd.f32 %v273, %v279
      %283 = vst.msk [vmem:[#allocation3] sm:$0xff] %vm61, %v281
      %284 = vst.msk [vmem:[#allocation3 + $0x8] sm:$0xff] %vm61, %v282
    $region37: #{tpu_custom_call.1} parent=1 // pred_fallthru
      _
    // Predicated region
    $region38: #{tpu_custom_call.1} parent=1 // pred_check
      _
    $region39: #{tpu_custom_call.1} parent=1 // pred_check_branch
      %286 = sbr.rel (0) target = $region41
    $region40: #{tpu_custom_call.1} parent=1 // pred_region
      %s288 = ssub.s32 256, 256
      %289 = vsyncadd [#allocation4], %s288
      %s290 = sshll.u32 [#allocation3], 4
      %s291 = int_to_ptr.vmem [resolvable:$true] %s290
      %296 = dma.vmem_to_hbm [thread:$0]  %s291, 256, %s7, [#allocation4], 128, 128, 8
    $region41: #{tpu_custom_call.1} parent=1 // pred_fallthru
      _
    // Predicated region
    $region42: #{tpu_custom_call.1} parent=1 // pred_check
      _
    $region43: #{tpu_custom_call.1} parent=1 // pred_check_branch
      %298 = sbr.rel (0) target = $region45
    $region44: #{tpu_custom_call.1} parent=1 // pred_region
      %299 = dma.done [#allocation4], 256
    $region45: #{tpu_custom_call.1} parent=1 // pred_fallthru
      _
    %300 = vsyncpa [#allocation4], 1

</llo_original>
